<compile_context>
chip_gen: v5e
topology: v5e:2x2
jax: 0.10.0
libtpu: 0.0.40
codegen_flags: <defaults>
</compile_context>

<pallas_src>
import math
from functools import partial

import jax
import jax.numpy as jnp
import numpy as np
from jax.experimental import pallas as pl
from jax.experimental.pallas import tpu as pltpu


def _choose_plan(n_tok, hw, dst_mxlen, n_parts, io_itemsize):
    """Pick the dst-token tile and scoped-VMEM limit from the actual chip's VMEM."""
    try:
        cap = int(pltpu.get_tpu_info().vmem_capacity_bytes)
    except Exception:
        cap = 64 * 1024 * 1024                       # conservative (v7x per-TC VMEM)
    budget = (cap * 3) // 4                          # headroom for compiler scratch

    # Per-batch resident blocks (block index depends only on the batch axis).
    resident = 2 * (2 * n_parts * n_tok * hw * 2)    # K+V bf16 parts, double-buffered
    resident += 2 * hw * hw * 2                      # head_block, double-buffered

    def step_bytes(t):
        io = 2 * 2 * t * hw * io_itemsize            # q + out tiles, double-buffered
        io += 2 * t * dst_mxlen * 4                  # idx tile, double-buffered
        # in-kernel temporaries: [C*T,S] one-hot (+ bf16 copy) and ~9 f32 [C*T,HW] arrays
        tmp = dst_mxlen * t * (6 * n_tok + 9 * hw * 4)
        return io + tmp

    cands = [n_tok] + [c for c in (1024, 512, 256, 128, 64, 32, 16, 8) if c < n_tok]
    t_tok = cands[-1]
    for c in cands:
        if resident + step_bytes(c) <= budget:
            t_tok = c
            break
    need = resident + step_bytes(t_tok)
    vmem_limit = int(min(budget, max(32 * 1024 * 1024, 2 * need)))
    return t_tok, vmem_limit


def _make_kernel(use_softmax: bool, width: int, n_src: int, n_parts: int):
    scale = -1.0 / math.sqrt(width)

    def kernel(idx_ref, q_ref, *refs):
        k_refs = refs[:n_parts]                     # per-batch resident bf16 K parts
        v_refs = refs[n_parts:2 * n_parts]          # per-batch resident bf16 V parts
        hb_ref = refs[2 * n_parts]                  # [HW, HW] 0/1 per-head block (bf16)
        out_ref = refs[2 * n_parts + 1]

        idx = idx_ref[...]                          # [T, C] int32; -1 marks an empty slot
        q = q_ref[0].astype(jnp.float32)            # [T, HW]  dst-token tile, all heads
        hb = hb_ref[...]
        t_tok, c_slots = idx.shape
        hw = q.shape[-1]

        # Stack the dst_mxlen slots along sublanes -> one [C*T, *] problem so every MXU
        # call sees M = C*T (batched slots).  All concats are f32/int32, sublane-aligned.
        src_iota = jax.lax.broadcasted_iota(jnp.int32, (t_tok, n_src), 1)   # [T, S]
        onehots, valids = [], []
        for c in range(c_slots):                    # dst_mxlen is small & static
            idx_c = idx[:, c:c + 1]                                    # [T, 1]
            onehots.append(jnp.where(idx_c == src_iota, 1.0, 0.0))     # [T, S] f32 0/1
            valids.append((idx_c >= 0).astype(jnp.float32))            # [T, 1] f32 0/1
        onehot = jnp.concatenate(onehots, axis=0).astype(jnp.bfloat16)  # [C*T, S]
        valid = jnp.concatenate(valids, axis=0)                         # [C*T, 1]
        q_rep = jnp.concatenate([q] * c_slots, axis=0)                  # [C*T, HW]

        # Batched gather of K/V rows on the MXU: exact because the selector is 0/1 and
        # the data is the host-side exact bf16 2-way split, accumulated in f32.
        # TODO(synk): swap for a true sublane/DMA gather once n_src is large.
        def gather(parts):
            acc = None
            for p in parts:
                d = jnp.dot(onehot, p[0], preferred_element_type=jnp.float32)
                acc = d if acc is None else acc + d
            return acc

        kg = gather(k_refs)                          # [C*T, HW] == k[src] (0 if empty)
        vg = gather(v_refs)                          # [C*T, HW]

        # Per-head L1 logits, replicated across each head's width lanes, via one batched
        # MXU reduction against the 0/1 head-block matrix (2-way bf16 split of the data).
        diff = jnp.abs(q_rep - kg)
        d_hi = diff.astype(jnp.bfloat16)
        d_lo = (diff - d_hi.astype(jnp.float32)).astype(jnp.bfloat16)
        red = (jnp.dot(d_hi, hb, preferred_element_type=jnp.float32) +
               jnp.dot(d_lo, hb, preferred_element_type=jnp.float32))
        logits = red * scale                         # [C*T, HW], <= 0 by construction

        # logits <= 0 and the reference's always-present zero-logit column pin the
        # softmax max at 0, so no running-max pass is needed; exp cannot overflow.
        e = jnp.exp(logits)                          # [C*T, HW]
        prod = e * vg                                # empty slots contribute 0 (vg == 0)

        # Fold the slot axis with static, sublane-aligned slices (streamed accumulation).
        vo = prod[0:t_tok]
        for c in range(1, c_slots):
            vo = vo + prod[c * t_tok:(c + 1) * t_tok]

        if use_softmax:
            em = e * valid                           # mask empty slots out of the denom
            den = em[0:t_tok]
            for c in range(1, c_slots):
                den = den + em[c * t_tok:(c + 1) * t_tok]
            vo = vo / (1.0 + den)                    # +1 == the implicit zero-logit slot

        out_ref[0] = vo.astype(out_ref.dtype)

    return kernel


@partial(jax.jit, static_argnames=("dst_mxlen", "src_mxlen", "use_softmax"))
def l1attn_sparse(v, q, k, coo, dst_mxlen, src_mxlen, use_softmax=True):
    """Matches L1AttnSparse.forward: returns [bs, n_tok, n_heads, width]."""
    del src_mxlen  # only needed by the backward pass of the reference module
    bs, n_tok, n_heads, width = q.shape
    hw = n_heads * width

    # Densify coo into a per-(dst, slot) source-index table; -1 == empty slot.
    dst, src, cnt = coo[:, 0], coo[:, 1], coo[:, 2]
    src_idx = jnp.full((n_tok, dst_mxlen), -1, jnp.int32).at[dst, cnt].set(
        src.astype(jnp.int32))

    # Fold heads onto the minor axis (free reshape): lane-dense I/O, no transposes.
    q2 = q.reshape(bs, n_tok, hw)

    # Host-side exact bf16 split of K/V (loop-invariant: done once, not per dst tile).
    if k.dtype == jnp.bfloat16:
        k_parts = (k.reshape(bs, n_tok, hw),)
        v_parts = (v.reshape(bs, n_tok, hw),)
    else:
        k2 = k.reshape(bs, n_tok, hw).astype(jnp.float32)
        v2 = v.reshape(bs, n_tok, hw).astype(jnp.float32)
        k_hi = k2.astype(jnp.bfloat16)
        k_lo = (k2 - k_hi.astype(jnp.float32)).astype(jnp.bfloat16)
        v_hi = v2.astype(jnp.bfloat16)
        v_lo = (v2 - v_hi.astype(jnp.float32)).astype(jnp.bfloat16)
        k_parts, v_parts = (k_hi, k_lo), (v_hi, v_lo)
    n_parts = len(k_parts)

    # Loop-invariant per-head 0/1 block matrix, built once on the host.
    lane_head = jnp.arange(hw, dtype=jnp.int32) // width
    head_block = (lane_head[:, None] == lane_head[None, :]).astype(jnp.bfloat16)

    # Generation-aware tiling / VMEM plan (v7x has 64 MiB/TC vs 128 MiB on v5e/v6e).
    t_tok, vmem_limit = _choose_plan(n_tok, hw, dst_mxlen, n_parts, q.dtype.itemsize)
    grid_t = pl.cdiv(n_tok, t_tok)
    n_pad = grid_t * t_tok
    if n_pad != n_tok:
        pad = n_pad - n_tok
        q2 = jnp.pad(q2, ((0, 0), (0, pad), (0, 0)))
        src_idx = jnp.pad(src_idx, ((0, pad), (0, 0)), constant_values=-1)

    kernel = _make_kernel(bool(use_softmax), width, n_tok, n_parts)

    kv_spec = pl.BlockSpec((1, n_tok, hw), lambda b, t: (b, 0, 0))  # per-batch resident
    in_specs = [
        pl.BlockSpec((t_tok, dst_mxlen), lambda b, t: (t, 0)),      # src_idx tile
        pl.BlockSpec((1, t_tok, hw), lambda b, t: (b, t, 0)),       # q tile
    ]
    in_specs += [kv_spec] * (2 * n_parts)                            # K/V bf16 parts
    in_specs += [pl.BlockSpec((hw, hw), lambda b, t: (0, 0))]        # head_block

    out = pl.pallas_call(
        kernel,
        out_shape=jax.ShapeDtypeStruct((bs, n_pad, hw), q.dtype),
        grid=(bs, grid_t),
        in_specs=in_specs,
        out_specs=pl.BlockSpec((1, t_tok, hw), lambda b, t: (b, t, 0)),
        compiler_params=pltpu.CompilerParams(
            dimension_semantics=("parallel", "parallel"),
            vmem_limit_bytes=vmem_limit,
        ),
    )(src_idx, q2, *k_parts, *v_parts, head_block)

    out = out[:, :n_tok, :]
    return out.reshape(bs, n_tok, n_heads, width)


def l1attn_sparse_reference(v, q, k, coo, dst_mxlen, use_softmax=True):
    """Pure-JAX transcription of the PyTorch forward, for validation."""
    bs, n_tok, n_heads, width = q.shape
    qq = jnp.transpose(q, (0, 2, 1, 3))[:, :, coo[:, 0], :]
    kk = jnp.transpose(k, (0, 2, 1, 3))[:, :, coo[:, 1], :]
    vv = jnp.transpose(v, (0, 2, 1, 3))
    scale = -1.0 / math.sqrt(width)
    ww = jnp.sum(jnp.abs(qq - kk), -1) * scale
    attn = jnp.full((bs, n_heads, n_tok, dst_mxlen + 1), -1e12, q.dtype)
    attn = attn.at[:, :, coo[:, 0], coo[:, 2]].set(ww)
    if use_softmax:
        attn = attn.at[:, :, :, -1].set(0.0)
        attn_sm = jax.nn.softmax(attn, -1)
    else:
        attn_sm = jnp.exp(attn)
    attn_sm = attn_sm[:, :, :, :-1]
    vw = jnp.zeros((bs, n_heads, n_tok, dst_mxlen, width), q.dtype)
    vw = vw.at[:, :, coo[:, 0], coo[:, 2], :].set(vv[:, :, coo[:, 1], :])
    return jnp.einsum('bhds,bhdsw->bdhw', attn_sm, vw, precision='highest')


if __name__ == "__main__":
    # small deterministic example; n_heads*width = 128 -> fully lane-dense I/O
    bs, n_tok, n_heads, width = 2, 8, 4, 32
    dst_mxlen, src_mxlen = 4, 4

    key = jax.random.PRNGKey(0)
    kq, kk_, kv = jax.random.split(key, 3)
    q = jax.random.normal(kq, (bs, n_tok, n_heads, width), jnp.float32)
    k = jax.random.normal(kk_, (bs, n_tok, n_heads, width), jnp.float32)
    v = jax.random.normal(kv, (bs, n_tok, n_heads, width), jnp.float32)

    # deterministic sparse connectivity: each dst token attends to 3 sources
    coo_rows = []
    for d in range(n_tok):
        for c, off in enumerate((0, 1, 3)):
            coo_rows.append([d, (d + off) % n_tok, c])
    coo = jnp.array(np.array(coo_rows, dtype=np.int32))   # [cl, 3]

    out = jax.block_until_ready(
        l1attn_sparse(v, q, k, coo, dst_mxlen=dst_mxlen, src_mxlen=src_mxlen,
                      use_softmax=True))
    ref = l1attn_sparse_reference(v, q, k, coo, dst_mxlen, use_softmax=True)
    np.testing.assert_allclose(np.asarray(out), np.asarray(ref), rtol=1e-4, atol=1e-4)

    # also exercise the no-softmax branch
    out2 = jax.block_until_ready(
        l1attn_sparse(v, q, k, coo, dst_mxlen=dst_mxlen, src_mxlen=src_mxlen,
                      use_softmax=False))
    ref2 = l1attn_sparse_reference(v, q, k, coo, dst_mxlen, use_softmax=False)
    np.testing.assert_allclose(np.asarray(out2), np.asarray(ref2), rtol=1e-4, atol=1e-4)

    print("KERNEL_OK")
</pallas_src>

<mosaic_0001>
module attributes {stable_mosaic.version = 11 : i64} {
  func.func @kernel(%arg0: i32, %arg1: i32, %arg2: memref<8x4xi32, #tpu.memory_space<vmem>>, %arg3: memref<1x8x128xf32, #tpu.memory_space<vmem>>, %arg4: memref<1x8x128xbf16, #tpu.memory_space<vmem>>, %arg5: memref<1x8x128xbf16, #tpu.memory_space<vmem>>, %arg6: memref<1x8x128xbf16, #tpu.memory_space<vmem>>, %arg7: memref<1x8x128xbf16, #tpu.memory_space<vmem>>, %arg8: memref<128x128xbf16, #tpu.memory_space<vmem>>, %arg9: memref<1x8x128xf32, #tpu.memory_space<vmem>>) attributes {dimension_semantics = [#tpu.dimension_semantics<parallel>, #tpu.dimension_semantics<parallel>], iteration_bounds = array<i64: 2, 1>, scalar_prefetch = 0 : i64, scratch_operands = 0 : i64, tpu.core_type = #tpu.core_type<tc>, window_params = [{transform_indices = @transform_0, window_bounds = array<i64: 8, 4>}, {transform_indices = @transform_1, window_bounds = array<i64: 1, 8, 128>}, {transform_indices = @transform_2, window_bounds = array<i64: 1, 8, 128>}, {transform_indices = @transform_3, window_bounds = array<i64: 1, 8, 128>}, {transform_indices = @transform_4, window_bounds = array<i64: 1, 8, 128>}, {transform_indices = @transform_5, window_bounds = array<i64: 1, 8, 128>}, {pipeline_mode = #tpu.pipeline_mode<synchronous>, transform_indices = @transform_6, window_bounds = array<i64: 128, 128>}, {transform_indices = @transform_7, window_bounds = array<i64: 1, 8, 128>}]} {
    %c0 = arith.constant 0 : index
    %c0_0 = arith.constant 0 : index
    %0 = vector.load %arg2[%c0, %c0_0] : memref<8x4xi32, #tpu.memory_space<vmem>>, vector<8x4xi32>
    %c0_1 = arith.constant 0 : index
    %c0_2 = arith.constant 0 : index
    %c0_3 = arith.constant 0 : index
    %1 = vector.load %arg3[%c0_1, %c0_2, %c0_3] : memref<1x8x128xf32, #tpu.memory_space<vmem>>, vector<1x8x128xf32>
    %2 = vector.shape_cast %1 : vector<1x8x128xf32> to vector<8x128xf32>
    %c0_4 = arith.constant 0 : index
    %c0_5 = arith.constant 0 : index
    %3 = vector.load %arg8[%c0_4, %c0_5] : memref<128x128xbf16, #tpu.memory_space<vmem>>, vector<128x128xbf16>
    %4 = tpu.iota {dimensions = array<i32: 1>} : vector<8x8xi32>
    %5 = vector.extract_strided_slice %0 {offsets = [0, 0], sizes = [8, 1], strides = [1, 1]} : vector<8x4xi32> to vector<8x1xi32>
    %6 = vector.broadcast %5 : vector<8x1xi32> to vector<8x8xi32>
    %7 = arith.cmpi eq, %6, %4 : vector<8x8xi32>
    %cst = arith.constant 1.000000e+00 : f32
    %cst_6 = arith.constant 0.000000e+00 : f32
    %8 = vector.broadcast %cst : f32 to vector<8x8xf32>
    %9 = vector.broadcast %cst_6 : f32 to vector<8x8xf32>
    %10 = arith.select %7, %8, %9 : vector<8x8xi1>, vector<8x8xf32>
    %c0_i32 = arith.constant 0 : i32
    %11 = vector.broadcast %c0_i32 : i32 to vector<8x1xi32>
    %12 = arith.cmpi sge, %5, %11 : vector<8x1xi32>
    %13 = arith.extui %12 : vector<8x1xi1> to vector<8x1xi32>
    %14 = arith.sitofp %13 : vector<8x1xi32> to vector<8x1xf32>
    %15 = vector.extract_strided_slice %0 {offsets = [0, 1], sizes = [8, 1], strides = [1, 1]} : vector<8x4xi32> to vector<8x1xi32>
    %16 = vector.broadcast %15 : vector<8x1xi32> to vector<8x8xi32>
    %17 = arith.cmpi eq, %16, %4 : vector<8x8xi32>
    %cst_7 = arith.constant 1.000000e+00 : f32
    %cst_8 = arith.constant 0.000000e+00 : f32
    %18 = vector.broadcast %cst_7 : f32 to vector<8x8xf32>
    %19 = vector.broadcast %cst_8 : f32 to vector<8x8xf32>
    %20 = arith.select %17, %18, %19 : vector<8x8xi1>, vector<8x8xf32>
    %c0_i32_9 = arith.constant 0 : i32
    %21 = vector.broadcast %c0_i32_9 : i32 to vector<8x1xi32>
    %22 = arith.cmpi sge, %15, %21 : vector<8x1xi32>
    %23 = arith.extui %22 : vector<8x1xi1> to vector<8x1xi32>
    %24 = arith.sitofp %23 : vector<8x1xi32> to vector<8x1xf32>
    %25 = vector.extract_strided_slice %0 {offsets = [0, 2], sizes = [8, 1], strides = [1, 1]} : vector<8x4xi32> to vector<8x1xi32>
    %26 = vector.broadcast %25 : vector<8x1xi32> to vector<8x8xi32>
    %27 = arith.cmpi eq, %26, %4 : vector<8x8xi32>
    %cst_10 = arith.constant 1.000000e+00 : f32
    %cst_11 = arith.constant 0.000000e+00 : f32
    %28 = vector.broadcast %cst_10 : f32 to vector<8x8xf32>
    %29 = vector.broadcast %cst_11 : f32 to vector<8x8xf32>
    %30 = arith.select %27, %28, %29 : vector<8x8xi1>, vector<8x8xf32>
    %c0_i32_12 = arith.constant 0 : i32
    %31 = vector.broadcast %c0_i32_12 : i32 to vector<8x1xi32>
    %32 = arith.cmpi sge, %25, %31 : vector<8x1xi32>
    %33 = arith.extui %32 : vector<8x1xi1> to vector<8x1xi32>
    %34 = arith.sitofp %33 : vector<8x1xi32> to vector<8x1xf32>
    %35 = vector.extract_strided_slice %0 {offsets = [0, 3], sizes = [8, 1], strides = [1, 1]} : vector<8x4xi32> to vector<8x1xi32>
    %36 = vector.broadcast %35 : vector<8x1xi32> to vector<8x8xi32>
    %37 = arith.cmpi eq, %36, %4 : vector<8x8xi32>
    %cst_13 = arith.constant 1.000000e+00 : f32
    %cst_14 = arith.constant 0.000000e+00 : f32
    %38 = vector.broadcast %cst_13 : f32 to vector<8x8xf32>
    %39 = vector.broadcast %cst_14 : f32 to vector<8x8xf32>
    %40 = arith.select %37, %38, %39 : vector<8x8xi1>, vector<8x8xf32>
    %c0_i32_15 = arith.constant 0 : i32
    %41 = vector.broadcast %c0_i32_15 : i32 to vector<8x1xi32>
    %42 = arith.cmpi sge, %35, %41 : vector<8x1xi32>
    %43 = arith.extui %42 : vector<8x1xi1> to vector<8x1xi32>
    %44 = arith.sitofp %43 : vector<8x1xi32> to vector<8x1xf32>
    %45 = tpu.concatenate %10, %20, %30, %40 in 0 : vector<8x8xf32>, vector<8x8xf32>, vector<8x8xf32>, vector<8x8xf32> -> vector<32x8xf32>
    %46 = arith.truncf %45 : vector<32x8xf32> to vector<32x8xbf16>
    %47 = tpu.concatenate %14, %24, %34, %44 in 0 : vector<8x1xf32>, vector<8x1xf32>, vector<8x1xf32>, vector<8x1xf32> -> vector<32x1xf32>
    %48 = tpu.concatenate %2, %2, %2, %2 in 0 : vector<8x128xf32>, vector<8x128xf32>, vector<8x128xf32>, vector<8x128xf32> -> vector<32x128xf32>
    %c0_16 = arith.constant 0 : index
    %c0_17 = arith.constant 0 : index
    %c0_18 = arith.constant 0 : index
    %49 = vector.load %arg4[%c0_16, %c0_17, %c0_18] : memref<1x8x128xbf16, #tpu.memory_space<vmem>>, vector<1x8x128xbf16>
    %50 = vector.shape_cast %49 : vector<1x8x128xbf16> to vector<8x128xbf16>
    %cst_19 = arith.constant dense<0.000000e+00> : vector<32x128xf32>
    %51 = tpu.matmul %46, %50, %cst_19 {dimension_numbers = #tpu.dot_dimension_numbers<[1], [0], [0], [1], [0, 0, 1, 1], [], []>} : vector<32x8xbf16>, vector<8x128xbf16>, vector<32x128xf32> -> vector<32x128xf32>
    %c0_20 = arith.constant 0 : index
    %c0_21 = arith.constant 0 : index
    %c0_22 = arith.constant 0 : index
    %52 = vector.load %arg5[%c0_20, %c0_21, %c0_22] : memref<1x8x128xbf16, #tpu.memory_space<vmem>>, vector<1x8x128xbf16>
    %53 = vector.shape_cast %52 : vector<1x8x128xbf16> to vector<8x128xbf16>
    %cst_23 = arith.constant dense<0.000000e+00> : vector<32x128xf32>
    %54 = tpu.matmul %46, %53, %cst_23 {dimension_numbers = #tpu.dot_dimension_numbers<[1], [0], [0], [1], [0, 0, 1, 1], [], []>} : vector<32x8xbf16>, vector<8x128xbf16>, vector<32x128xf32> -> vector<32x128xf32>
    %55 = arith.addf %51, %54 : vector<32x128xf32>
    %c0_24 = arith.constant 0 : index
    %c0_25 = arith.constant 0 : index
    %c0_26 = arith.constant 0 : index
    %56 = vector.load %arg6[%c0_24, %c0_25, %c0_26] : memref<1x8x128xbf16, #tpu.memory_space<vmem>>, vector<1x8x128xbf16>
    %57 = vector.shape_cast %56 : vector<1x8x128xbf16> to vector<8x128xbf16>
    %cst_27 = arith.constant dense<0.000000e+00> : vector<32x128xf32>
    %58 = tpu.matmul %46, %57, %cst_27 {dimension_numbers = #tpu.dot_dimension_numbers<[1], [0], [0], [1], [0, 0, 1, 1], [], []>} : vector<32x8xbf16>, vector<8x128xbf16>, vector<32x128xf32> -> vector<32x128xf32>
    %c0_28 = arith.constant 0 : index
    %c0_29 = arith.constant 0 : index
    %c0_30 = arith.constant 0 : index
    %59 = vector.load %arg7[%c0_28, %c0_29, %c0_30] : memref<1x8x128xbf16, #tpu.memory_space<vmem>>, vector<1x8x128xbf16>
    %60 = vector.shape_cast %59 : vector<1x8x128xbf16> to vector<8x128xbf16>
    %cst_31 = arith.constant dense<0.000000e+00> : vector<32x128xf32>
    %61 = tpu.matmul %46, %60, %cst_31 {dimension_numbers = #tpu.dot_dimension_numbers<[1], [0], [0], [1], [0, 0, 1, 1], [], []>} : vector<32x8xbf16>, vector<8x128xbf16>, vector<32x128xf32> -> vector<32x128xf32>
    %62 = arith.addf %58, %61 : vector<32x128xf32>
    %63 = arith.subf %48, %55 : vector<32x128xf32>
    %64 = math.absf %63 : vector<32x128xf32>
    %65 = arith.truncf %64 : vector<32x128xf32> to vector<32x128xbf16>
    %66 = arith.extf %65 : vector<32x128xbf16> to vector<32x128xf32>
    %67 = arith.subf %64, %66 : vector<32x128xf32>
    %68 = arith.truncf %67 : vector<32x128xf32> to vector<32x128xbf16>
    %cst_32 = arith.constant dense<0.000000e+00> : vector<32x128xf32>
    %69 = tpu.matmul %65, %3, %cst_32 {dimension_numbers = #tpu.dot_dimension_numbers<[1], [0], [0], [1], [0, 0, 1, 1], [], []>} : vector<32x128xbf16>, vector<128x128xbf16>, vector<32x128xf32> -> vector<32x128xf32>
    %cst_33 = arith.constant dense<0.000000e+00> : vector<32x128xf32>
    %70 = tpu.matmul %68, %3, %cst_33 {dimension_numbers = #tpu.dot_dimension_numbers<[1], [0], [0], [1], [0, 0, 1, 1], [], []>} : vector<32x128xbf16>, vector<128x128xbf16>, vector<32x128xf32> -> vector<32x128xf32>
    %71 = arith.addf %69, %70 : vector<32x128xf32>
    %cst_34 = arith.constant -0.176776692 : f32
    %72 = vector.broadcast %cst_34 : f32 to vector<32x128xf32>
    %73 = arith.mulf %71, %72 : vector<32x128xf32>
    %74 = math.exp %73 : vector<32x128xf32>
    %75 = arith.mulf %74, %62 : vector<32x128xf32>
    %76 = vector.extract_strided_slice %75 {offsets = [0, 0], sizes = [8, 128], strides = [1, 1]} : vector<32x128xf32> to vector<8x128xf32>
    %77 = vector.extract_strided_slice %75 {offsets = [8, 0], sizes = [8, 128], strides = [1, 1]} : vector<32x128xf32> to vector<8x128xf32>
    %78 = arith.addf %76, %77 : vector<8x128xf32>
    %79 = vector.extract_strided_slice %75 {offsets = [16, 0], sizes = [8, 128], strides = [1, 1]} : vector<32x128xf32> to vector<8x128xf32>
    %80 = arith.addf %78, %79 : vector<8x128xf32>
    %81 = vector.extract_strided_slice %75 {offsets = [24, 0], sizes = [8, 128], strides = [1, 1]} : vector<32x128xf32> to vector<8x128xf32>
    %82 = arith.addf %80, %81 : vector<8x128xf32>
    %83 = vector.broadcast %47 : vector<32x1xf32> to vector<32x128xf32>
    %84 = arith.mulf %74, %83 : vector<32x128xf32>
    %85 = vector.extract_strided_slice %84 {offsets = [0, 0], sizes = [8, 128], strides = [1, 1]} : vector<32x128xf32> to vector<8x128xf32>
    %86 = vector.extract_strided_slice %84 {offsets = [8, 0], sizes = [8, 128], strides = [1, 1]} : vector<32x128xf32> to vector<8x128xf32>
    %87 = arith.addf %85, %86 : vector<8x128xf32>
    %88 = vector.extract_strided_slice %84 {offsets = [16, 0], sizes = [8, 128], strides = [1, 1]} : vector<32x128xf32> to vector<8x128xf32>
    %89 = arith.addf %87, %88 : vector<8x128xf32>
    %90 = vector.extract_strided_slice %84 {offsets = [24, 0], sizes = [8, 128], strides = [1, 1]} : vector<32x128xf32> to vector<8x128xf32>
    %91 = arith.addf %89, %90 : vector<8x128xf32>
    %cst_35 = arith.constant 1.000000e+00 : f32
    %92 = vector.broadcast %cst_35 : f32 to vector<8x128xf32>
    %93 = arith.addf %92, %91 : vector<8x128xf32>
    %94 = arith.divf %82, %93 : vector<8x128xf32>
    %c0_36 = arith.constant 0 : index
    %c0_37 = arith.constant 0 : index
    %c0_38 = arith.constant 0 : index
    %95 = vector.load %arg9[%c0_36, %c0_37, %c0_38] : memref<1x8x128xf32, #tpu.memory_space<vmem>>, vector<1x8x128xf32>
    %96 = vector.shape_cast %95 : vector<1x8x128xf32> to vector<8x128xf32>
    %97 = vector.shape_cast %94 : vector<8x128xf32> to vector<1x8x128xf32>
    tpu.vector_store %arg9[%c0_36, %c0_37, %c0_38], %97 {strides = array<i32>} : memref<1x8x128xf32, #tpu.memory_space<vmem>>, vector<1x8x128xf32>,
    return
  }
  func.func @transform_0(%arg0: i32, %arg1: i32) -> (i32, i32) {
    %c0_i32 = arith.constant 0 : i32
    %c0_i32_0 = arith.constant 0 : i32
    return %arg1, %c0_i32 : i32, i32
  }
  func.func @transform_1(%arg0: i32, %arg1: i32) -> (i32, i32, i32) {
    %c0_i32 = arith.constant 0 : i32
    %c0_i32_0 = arith.constant 0 : i32
    return %arg0, %arg1, %c0_i32 : i32, i32, i32
  }
  func.func @transform_2(%arg0: i32, %arg1: i32) -> (i32, i32, i32) {
    %c0_i32 = arith.constant 0 : i32
    %c0_i32_0 = arith.constant 0 : i32
    %c0_i32_1 = arith.constant 0 : i32
    return %arg0, %c0_i32, %c0_i32_0 : i32, i32, i32
  }
  func.func @transform_3(%arg0: i32, %arg1: i32) -> (i32, i32, i32) {
    %c0_i32 = arith.constant 0 : i32
    %c0_i32_0 = arith.constant 0 : i32
    %c0_i32_1 = arith.constant 0 : i32
    return %arg0, %c0_i32, %c0_i32_0 : i32, i32, i32
  }
  func.func @transform_4(%arg0: i32, %arg1: i32) -> (i32, i32, i32) {
    %c0_i32 = arith.constant 0 : i32
    %c0_i32_0 = arith.constant 0 : i32
    %c0_i32_1 = arith.constant 0 : i32
    return %arg0, %c0_i32, %c0_i32_0 : i32, i32, i32
  }
  func.func @transform_5(%arg0: i32, %arg1: i32) -> (i32, i32, i32) {
    %c0_i32 = arith.constant 0 : i32
    %c0_i32_0 = arith.constant 0 : i32
    %c0_i32_1 = arith.constant 0 : i32
    return %arg0, %c0_i32, %c0_i32_0 : i32, i32, i32
  }
  func.func @transform_6(%arg0: i32, %arg1: i32) -> (i32, i32) {
    %c0_i32 = arith.constant 0 : i32
    %c0_i32_0 = arith.constant 0 : i32
    %c0_i32_1 = arith.constant 0 : i32
    return %c0_i32, %c0_i32_0 : i32, i32
  }
  func.func @transform_7(%arg0: i32, %arg1: i32) -> (i32, i32, i32) {
    %c0_i32 = arith.constant 0 : i32
    %c0_i32_0 = arith.constant 0 : i32
    return %arg0, %arg1, %c0_i32 : i32, i32, i32
  }
}

</mosaic_0001>

<llo_original>
// kernel: l1attn_sparse.1
$region0: #{l1attn_sparse.1}
  #allocation0 [shape = 'u32[]', space=smem, size = 0x4, offset = 0x4, fixed_abs, tag = 'smem constant byte address 0x4 - core index']
  #allocation1 [shape = 'u32[72,128]{1,0:T(1,128)}', space=vmem, size = 0x9000, scoped, tag = 'internal scratch']
  %s0 = inlined_call_operand.vmem [shape: s32[8,4], index: 0, kind: input, shape index: {}]
  %s1 = inlined_call_operand.vmem [shape: f32[2,8,128], index: 1, kind: input, shape index: {}]
  %s2 = inlined_call_operand.vmem [shape: bf16[2,8,128], index: 2, kind: input, shape index: {}]
  %s3 = inlined_call_operand.vmem [shape: bf16[2,8,128], index: 3, kind: input, shape index: {}]
  %s4 = inlined_call_operand.vmem [shape: bf16[2,8,128], index: 4, kind: input, shape index: {}]
  %s5 = inlined_call_operand.vmem [shape: bf16[2,8,128], index: 5, kind: input, shape index: {}]
  %s6 = inlined_call_operand.vmem [shape: bf16[128,128], index: 6, kind: input, shape index: {}]
  %s7 = inlined_call_operand.vmem [shape: f32[2,8,128], index: 7, kind: output, shape index: {}]
  %s8 = sld [smem:[#allocation0]]
  $region61: #{l1attn_sparse.1} parent=0
    _
  %s10 = ssub.s32 1, %s8
  %s11 = scalar_select 0, %s10, %s8
  loop: start=0, step=1, limit=4
  $region2: #{l1attn_sparse.1} parent=0 // loop_pre_header
    _
  $region3: #{l1attn_sparse.1} parent=0 // loop_header
    %s13 = sphi 0, %s17
    %p14 = scmp.ge.s32.totalorder %s13, 4
    %s20 = sphi 0, %s32
    %s21 = sphi 0, %s28
    %s22 = sphi 0, %s20
    %s23 = sphi 0, %s21
    %s24 = sphi 0, %s22
    %s25 = sphi 0, %s23
    %s35 = sphi 0, %s37
    %s38 = sphi 0, %s35
    %s39 = sphi 0, %s38
    %s55 = sphi 0, %s39
    %s63 = sphi 0, %s65
    %s66 = sphi 0, %s63
    %s67 = sphi 0, %s66
    %s83 = sphi 0, %s67
    %s89 = sphi 0, %s91
    %s92 = sphi 0, %s89
    %s93 = sphi 0, %s92
    %s109 = sphi 0, %s93
    %s115 = sphi 0, %s117
    %s118 = sphi 0, %s115
    %s119 = sphi 0, %s118
    %s135 = sphi 0, %s119
    %s141 = sphi 0, %s143
    %s144 = sphi 0, %s141
    %s145 = sphi 0, %s144
    %s161 = sphi 0, %s145
    %s167 = sphi 0, %s169
    %s170 = sphi 0, %s167
    %s171 = sphi 0, %s170
    %s187 = sphi 0, %s171
    %s191 = sphi 0, %s191
    %s193 = sphi 0, %s191
    %s194 = sphi 0, %s193
    %s208 = sphi 0, %s194
    %s216 = sphi 0, %s218
    %s219 = sphi 0, %s216
    %s220 = sphi 0, %s219
    %s236 = sphi 0, %s220
  $region4: #{l1attn_sparse.1} parent=0 // loop_header_branch
    %16 = sbr.rel (%p14) target = $region8
  $region5: #{l1attn_sparse.1} parent=0 // loop_body
    %s18 = ssub.s32 %s13, 1
    %s19 = ssub.s32 %s13, 2
    %s26 = sadd.s32 1, %s21
    %p27 = scmp.ge.s32.totalorder %s26, 1
    %s28 = scalar_select %p27, 0, %s26
    %s29 = sadd.s32 1, %s20
    %s30 = scalar_select %p27, %s29, %s20
    %p31 = scmp.ge.s32.totalorder %s30, 2
    %s32 = scalar_select %p31, 0, %s30
    %s33 = ssub.s32 %s21, %s28
    %p34 = scmp.eq.s32.totalorder %s33, 0
    %s36 = sadd.s32 %s35, 1
    %s37 = scalar_select %p34, %s35, %s36
    %p40 = pneg %p34
    %p41 = scmp.eq.s32.totalorder %s13, 1
    %p42 = por %p40, %p41
    %p43 = scmp.ne.s32.totalorder %s35, %s38
    %p44 = scmp.eq.s32.totalorder %s13, 0
    %p45 = por %p43, %p44
    %p46 = scmp.ne.s32.totalorder %s35, %s38
    %p47 = scmp.eq.s32.totalorder %s18, 1
    %p48 = por %p46, %p47
    %p49 = scmp.ne.s32.totalorder %s38, %s39
    %p50 = scmp.eq.s32.totalorder %s18, 0
    %p51 = por %p49, %p50
    %p52 = scmp.ne.s32.totalorder %s38, %s39
    %p53 = scmp.eq.s32.totalorder %s19, 1
    %p54 = por %p52, %p53
    %p56 = scmp.ne.s32.totalorder %s39, %s55
    %p57 = scmp.eq.s32.totalorder %s19, 0
    %p58 = por %p56, %p57
    %s59 = ssub.s32 %s20, %s32
    %s60 = ssub.s32 %s21, %s28
    %s61 = sor.u32 %s59, %s60
    %p62 = scmp.eq.s32.totalorder %s61, 0
    %s64 = sadd.s32 %s63, 1
    %s65 = scalar_select %p62, %s63, %s64
    %p68 = pneg %p62
    %p69 = scmp.eq.s32.totalorder %s13, 1
    %p70 = por %p68, %p69
    %p71 = scmp.ne.s32.totalorder %s63, %s66
    %p72 = scmp.eq.s32.totalorder %s13, 0
    %p73 = por %p71, %p72
    %p74 = scmp.ne.s32.totalorder %s63, %s66
    %p75 = scmp.eq.s32.totalorder %s18, 1
    %p76 = por %p74, %p75
    %p77 = scmp.ne.s32.totalorder %s66, %s67
    %p78 = scmp.eq.s32.totalorder %s18, 0
    %p79 = por %p77, %p78
    %p80 = scmp.ne.s32.totalorder %s66, %s67
    %p81 = scmp.eq.s32.totalorder %s19, 1
    %p82 = por %p80, %p81
    %p84 = scmp.ne.s32.totalorder %s67, %s83
    %p85 = scmp.eq.s32.totalorder %s19, 0
    %p86 = por %p84, %p85
    %s87 = ssub.s32 %s20, %s32
    %p88 = scmp.eq.s32.totalorder %s87, 0
    %s90 = sadd.s32 %s89, 1
    %s91 = scalar_select %p88, %s89, %s90
    %p94 = pneg %p88
    %p95 = scmp.eq.s32.totalorder %s13, 1
    %p96 = por %p94, %p95
    %p97 = scmp.ne.s32.totalorder %s89, %s92
    %p98 = scmp.eq.s32.totalorder %s13, 0
    %p99 = por %p97, %p98
    %p100 = scmp.ne.s32.totalorder %s89, %s92
    %p101 = scmp.eq.s32.totalorder %s18, 1
    %p102 = por %p100, %p101
    %p103 = scmp.ne.s32.totalorder %s92, %s93
    %p104 = scmp.eq.s32.totalorder %s18, 0
    %p105 = por %p103, %p104
    %p106 = scmp.ne.s32.totalorder %s92, %s93
    %p107 = scmp.eq.s32.totalorder %s19, 1
    %p108 = por %p106, %p107
    %p110 = scmp.ne.s32.totalorder %s93, %s109
    %p111 = scmp.eq.s32.totalorder %s19, 0
    %p112 = por %p110, %p111
    %s113 = ssub.s32 %s20, %s32
    %p114 = scmp.eq.s32.totalorder %s113, 0
    %s116 = sadd.s32 %s115, 1
    %s117 = scalar_select %p114, %s115, %s116
    %p120 = pneg %p114
    %p121 = scmp.eq.s32.totalorder %s13, 1
    %p122 = por %p120, %p121
    %p123 = scmp.ne.s32.totalorder %s115, %s118
    %p124 = scmp.eq.s32.totalorder %s13, 0
    %p125 = por %p123, %p124
    %p126 = scmp.ne.s32.totalorder %s115, %s118
    %p127 = scmp.eq.s32.totalorder %s18, 1
    %p128 = por %p126, %p127
    %p129 = scmp.ne.s32.totalorder %s118, %s119
    %p130 = scmp.eq.s32.totalorder %s18, 0
    %p131 = por %p129, %p130
    %p132 = scmp.ne.s32.totalorder %s118, %s119
    %p133 = scmp.eq.s32.totalorder %s19, 1
    %p134 = por %p132, %p133
    %p136 = scmp.ne.s32.totalorder %s119, %s135
    %p137 = scmp.eq.s32.totalorder %s19, 0
    %p138 = por %p136, %p137
    %s139 = ssub.s32 %s20, %s32
    %p140 = scmp.eq.s32.totalorder %s139, 0
    %s142 = sadd.s32 %s141, 1
    %s143 = scalar_select %p140, %s141, %s142
    %p146 = pneg %p140
    %p147 = scmp.eq.s32.totalorder %s13, 1
    %p148 = por %p146, %p147
    %p149 = scmp.ne.s32.totalorder %s141, %s144
    %p150 = scmp.eq.s32.totalorder %s13, 0
    %p151 = por %p149, %p150
    %p152 = scmp.ne.s32.totalorder %s141, %s144
    %p153 = scmp.eq.s32.totalorder %s18, 1
    %p154 = por %p152, %p153
    %p155 = scmp.ne.s32.totalorder %s144, %s145
    %p156 = scmp.eq.s32.totalorder %s18, 0
    %p157 = por %p155, %p156
    %p158 = scmp.ne.s32.totalorder %s144, %s145
    %p159 = scmp.eq.s32.totalorder %s19, 1
    %p160 = por %p158, %p159
    %p162 = scmp.ne.s32.totalorder %s145, %s161
    %p163 = scmp.eq.s32.totalorder %s19, 0
    %p164 = por %p162, %p163
    %s165 = ssub.s32 %s20, %s32
    %p166 = scmp.eq.s32.totalorder %s165, 0
    %s168 = sadd.s32 %s167, 1
    %s169 = scalar_select %p166, %s167, %s168
    %p172 = pneg %p166
    %p173 = scmp.eq.s32.totalorder %s13, 1
    %p174 = por %p172, %p173
    %p175 = scmp.ne.s32.totalorder %s167, %s170
    %p176 = scmp.eq.s32.totalorder %s13, 0
    %p177 = por %p175, %p176
    %p178 = scmp.ne.s32.totalorder %s167, %s170
    %p179 = scmp.eq.s32.totalorder %s18, 1
    %p180 = por %p178, %p179
    %p181 = scmp.ne.s32.totalorder %s170, %s171
    %p182 = scmp.eq.s32.totalorder %s18, 0
    %p183 = por %p181, %p182
    %p184 = scmp.ne.s32.totalorder %s170, %s171
    %p185 = scmp.eq.s32.totalorder %s19, 1
    %p186 = por %p184, %p185
    %p188 = scmp.ne.s32.totalorder %s171, %s187
    %p189 = scmp.eq.s32.totalorder %s19, 0
    %p190 = por %p188, %p189
    %s192 = sadd.s32 %s191, 1
    %p195 = scmp.eq.s32.totalorder %s13, 1
    %p196 = scmp.ne.s32.totalorder %s191, %s193
    %p197 = scmp.eq.s32.totalorder %s13, 0
    %p198 = por %p196, %p197
    %p199 = scmp.ne.s32.totalorder %s191, %s193
    %p200 = scmp.eq.s32.totalorder %s18, 1
    %p201 = por %p199, %p200
    %p202 = scmp.ne.s32.totalorder %s193, %s194
    %p203 = scmp.eq.s32.totalorder %s18, 0
    %p204 = por %p202, %p203
    %p205 = scmp.ne.s32.totalorder %s193, %s194
    %p206 = scmp.eq.s32.totalorder %s19, 1
    %p207 = por %p205, %p206
    %p209 = scmp.ne.s32.totalorder %s194, %s208
    %p210 = scmp.eq.s32.totalorder %s19, 0
    %p211 = por %p209, %p210
    %s212 = ssub.s32 %s20, %s32
    %s213 = ssub.s32 %s21, %s28
    %s214 = sor.u32 %s212, %s213
    %p215 = scmp.eq.s32.totalorder %s214, 0
    %s217 = sadd.s32 %s216, 1
    %s218 = scalar_select %p215, %s216, %s217
    %p221 = pneg %p215
    %p222 = scmp.eq.s32.totalorder %s13, 1
    %p223 = por %p221, %p222
    %p224 = scmp.ne.s32.totalorder %s216, %s219
    %p225 = scmp.eq.s32.totalorder %s13, 0
    %p226 = por %p224, %p225
    %p227 = scmp.ne.s32.totalorder %s216, %s219
    %p228 = scmp.eq.s32.totalorder %s18, 1
    %p229 = por %p227, %p228
    %p230 = scmp.ne.s32.totalorder %s219, %s220
    %p231 = scmp.eq.s32.totalorder %s18, 0
    %p232 = por %p230, %p231
    %p233 = scmp.ne.s32.totalorder %s219, %s220
    %p234 = scmp.eq.s32.totalorder %s19, 1
    %p235 = por %p233, %p234
    %p237 = scmp.ne.s32.totalorder %s220, %s236
    %p238 = scmp.eq.s32.totalorder %s19, 0
    %p239 = por %p237, %p238
    %p240 = scmp.le.s32.totalorder 1, %s13
    %p241 = scmp.lt.s32.totalorder %s13, 3
    %p242 = pnand %p240, %p241
    %p243 = pneg %p242
    // Predicated region
    $region9: #{l1attn_sparse.1} parent=5 // pred_check
      _
    $region10: #{l1attn_sparse.1} parent=5 // pred_check_branch
      %245 = sbr.rel (%p242) target = $region12
    $region11: #{l1attn_sparse.1} parent=5 // pred_region
      %s246 = ssub.s32 %s13, 1
      // Predicated region
      $region13: #{l1attn_sparse.1} parent=11 // pred_check
        %p247 = pneg %p51
      $region14: #{l1attn_sparse.1} parent=11 // pred_check_branch
        %249 = sbr.rel (%p247) target = $region16
      $region15: #{l1attn_sparse.1} parent=11 // pred_region
        %p250 = scmp.lt.s32.totalorder %s23, 0
        %s251 = scalar_select %p250, %s23, 0
        %s252 = smul.addr %s251, 8
        %s253 = scalar_lea.vmem %s0, %s252
      $region16: #{l1attn_sparse.1} parent=11 // pred_fallthru
        _
      // Predicated region
      $region17: #{l1attn_sparse.1} parent=11 // pred_check
        %p254 = pneg %p204
      $region18: #{l1attn_sparse.1} parent=11 // pred_check_branch
        %256 = sbr.rel (%p254) target = $region20
      $region19: #{l1attn_sparse.1} parent=11 // pred_region
        _
      $region20: #{l1attn_sparse.1} parent=11 // pred_fallthru
        _
    $region12: #{l1attn_sparse.1} parent=5 // pred_fallthru
      _
    %p257 = scmp.lt.s32.totalorder %s13, 2
    // Predicated region
    $region21: #{l1attn_sparse.1} parent=5 // pred_check
      %p258 = pneg %p257
    $region22: #{l1attn_sparse.1} parent=5 // pred_check_branch
      %260 = sbr.rel (%p258) target = $region24
    $region23: #{l1attn_sparse.1} parent=5 // pred_region
      // Predicated region
      $region25: #{l1attn_sparse.1} parent=23 // pred_check
        %p261 = pneg %p73
      $region26: #{l1attn_sparse.1} parent=23 // pred_check_branch
        %263 = sbr.rel (%p261) target = $region28
      $region27: #{l1attn_sparse.1} parent=23 // pred_region
        %p264 = scmp.lt.s32.totalorder %s20, 1
        %s265 = scalar_select %p264, %s20, 1
        %p266 = scmp.lt.s32.totalorder %s21, 0
        %s267 = scalar_select %p266, %s21, 0
        %s268 = sadd.s32 %s267, %s265
        %s269 = smul.addr %s268, 8
        %s270 = scalar_lea.vmem %s1, %s269
      $region28: #{l1attn_sparse.1} parent=23 // pred_fallthru
        _
      // Predicated region
      $region29: #{l1attn_sparse.1} parent=23 // pred_check
        %p271 = pneg %p99
      $region30: #{l1attn_sparse.1} parent=23 // pred_check_branch
        %273 = sbr.rel (%p271) target = $region32
      $region31: #{l1attn_sparse.1} parent=23 // pred_region
        %p274 = scmp.lt.s32.totalorder %s20, 1
        %s275 = scalar_select %p274, %s20, 1
        %s276 = smul.addr %s275, 4
        %s277 = scalar_lea.vmem %s2, %s276
      $region32: #{l1attn_sparse.1} parent=23 // pred_fallthru
        _
      // Predicated region
      $region33: #{l1attn_sparse.1} parent=23 // pred_check
        %p278 = pneg %p125
      $region34: #{l1attn_sparse.1} parent=23 // pred_check_branch
        %280 = sbr.rel (%p278) target = $region36
      $region35: #{l1attn_sparse.1} parent=23 // pred_region
        %p281 = scmp.lt.s32.totalorder %s20, 1
        %s282 = scalar_select %p281, %s20, 1
        %s283 = smul.addr %s282, 4
        %s284 = scalar_lea.vmem %s3, %s283
      $region36: #{l1attn_sparse.1} parent=23 // pred_fallthru
        _
      // Predicated region
      $region37: #{l1attn_sparse.1} parent=23 // pred_check
        %p285 = pneg %p151
      $region38: #{l1attn_sparse.1} parent=23 // pred_check_branch
        %287 = sbr.rel (%p285) target = $region40
      $region39: #{l1attn_sparse.1} parent=23 // pred_region
        %p288 = scmp.lt.s32.totalorder %s20, 1
        %s289 = scalar_select %p288, %s20, 1
        %s290 = smul.addr %s289, 4
        %s291 = scalar_lea.vmem %s4, %s290
      $region40: #{l1attn_sparse.1} parent=23 // pred_fallthru
        _
      // Predicated region
      $region41: #{l1attn_sparse.1} parent=23 // pred_check
        %p292 = pneg %p177
      $region42: #{l1attn_sparse.1} parent=23 // pred_check_branch
        %294 = sbr.rel (%p292) target = $region44
      $region43: #{l1attn_sparse.1} parent=23 // pred_region
        %p295 = scmp.lt.s32.totalorder %s20, 1
        %s296 = scalar_select %p295, %s20, 1
        %s297 = smul.addr %s296, 4
        %s298 = scalar_lea.vmem %s5, %s297
      $region44: #{l1attn_sparse.1} parent=23 // pred_fallthru
        _
    $region24: #{l1attn_sparse.1} parent=5 // pred_fallthru
      _
    %p299 = scmp.le.s32.totalorder 1, %s13
    %p300 = scmp.lt.s32.totalorder %s13, 3
    %p301 = pnand %p299, %p300
    %p302 = pneg %p301
    // Predicated region
    $region45: #{l1attn_sparse.1} parent=5 // pred_check
      _
    $region46: #{l1attn_sparse.1} parent=5 // pred_check_branch
      %304 = sbr.rel (%p301) target = $region48
    $region47: #{l1attn_sparse.1} parent=5 // pred_region
      %s305 = ssub.s32 %s13, 1
      %p306 = scmp.lt.s32.totalorder %s23, 0
      %s307 = scalar_select %p306, %s23, 0
      %s308 = smul.addr %s307, 8
      %s309 = scalar_lea.vmem %s0, %s308
      %p310 = pneg %p51
      %p311 = pneg %p48
      %p312 = scmp.lt.s32.totalorder %s22, 1
      %s313 = scalar_select %p312, %s22, 1
      %p314 = scmp.lt.s32.totalorder %s23, 0
      %s315 = scalar_select %p314, %s23, 0
      %s316 = sadd.s32 %s315, %s313
      %s317 = smul.addr %s316, 8
      %s318 = scalar_lea.vmem %s1, %s317
      %p319 = pneg %p79
      %p320 = pneg %p76
      %p321 = scmp.lt.s32.totalorder %s22, 1
      %s322 = scalar_select %p321, %s22, 1
      %s323 = smul.addr %s322, 4
      %s324 = scalar_lea.vmem %s2, %s323
      %p325 = pneg %p105
      %p326 = pneg %p102
      %p327 = scmp.lt.s32.totalorder %s22, 1
      %s328 = scalar_select %p327, %s22, 1
      %s329 = smul.addr %s328, 4
      %s330 = scalar_lea.vmem %s3, %s329
      %p331 = pneg %p131
      %p332 = pneg %p128
      %p333 = scmp.lt.s32.totalorder %s22, 1
      %s334 = scalar_select %p333, %s22, 1
      %s335 = smul.addr %s334, 4
      %s336 = scalar_lea.vmem %s4, %s335
      %p337 = pneg %p157
      %p338 = pneg %p154
      %p339 = scmp.lt.s32.totalorder %s22, 1
      %s340 = scalar_select %p339, %s22, 1
      %s341 = smul.addr %s340, 4
      %s342 = scalar_lea.vmem %s5, %s341
      %p343 = pneg %p183
      %p344 = pneg %p180
      %p345 = pneg %p204
      %p346 = pneg %p201
      %p347 = pneg %p232
      %p348 = pneg %p229
      %p349 = scmp.lt.s32.totalorder %s22, 1
      %s350 = scalar_select %p349, %s22, 1
      %p351 = scmp.lt.s32.totalorder %s23, 0
      %s352 = scalar_select %p351, %s23, 0
      %s353 = sadd.s32 %s352, %s350
      %s354 = smul.addr %s353, 8
      %s355 = scalar_lea.vmem %s7, %s354
      %p356 = scmp.lt.s32.totalorder %s23, 0
      %s357 = scalar_select %p356, %s23, 0
      %s358 = smul.addr %s357, 8
      %s359 = scalar_lea.vmem %s0, %s358
      %p360 = scmp.lt.s32.totalorder %s22, 1
      %s361 = scalar_select %p360, %s22, 1
      %p362 = scmp.lt.s32.totalorder %s23, 0
      %s363 = scalar_select %p362, %s23, 0
      %s364 = sadd.s32 %s363, %s361
      %s365 = smul.addr %s364, 8
      %s366 = scalar_lea.vmem %s1, %s365
      %p367 = scmp.lt.s32.totalorder %s22, 1
      %s368 = scalar_select %p367, %s22, 1
      %s369 = smul.addr %s368, 4
      %s370 = scalar_lea.vmem %s2, %s369
      %p371 = scmp.lt.s32.totalorder %s22, 1
      %s372 = scalar_select %p371, %s22, 1
      %s373 = smul.addr %s372, 4
      %s374 = scalar_lea.vmem %s3, %s373
      %p375 = scmp.lt.s32.totalorder %s22, 1
      %s376 = scalar_select %p375, %s22, 1
      %s377 = smul.addr %s376, 4
      %s378 = scalar_lea.vmem %s4, %s377
      %p379 = scmp.lt.s32.totalorder %s22, 1
      %s380 = scalar_select %p379, %s22, 1
      %s381 = smul.addr %s380, 4
      %s382 = scalar_lea.vmem %s5, %s381
      %p383 = scmp.lt.s32.totalorder %s22, 1
      %s384 = scalar_select %p383, %s22, 1
      %p385 = scmp.lt.s32.totalorder %s23, 0
      %s386 = scalar_select %p385, %s23, 0
      %s387 = sadd.s32 %s386, %s384
      %s388 = smul.addr %s387, 8
      %s389 = scalar_lea.vmem %s7, %s388
      %v391 = vld [vmem:[%s359] sm:$0xff]
      %v392 = vld [vmem:[%s366] sm:$0xff]
      %v393 = vld [vmem:[%s6] sm:$0xf]
      %v394 = vld [vmem:[%s6 + $0x4] sm:$0xf]
      %v395 = vld [vmem:[%s6 + $0x8] sm:$0xf]
      %v396 = vld [vmem:[%s6 + $0xc] sm:$0xf]
      %v397 = vld [vmem:[%s6 + $0x10] sm:$0xf]
      %v398 = vld [vmem:[%s6 + $0x14] sm:$0xf]
      %v399 = vld [vmem:[%s6 + $0x18] sm:$0xf]
      %v400 = vld [vmem:[%s6 + $0x1c] sm:$0xf]
      %v401 = vld [vmem:[%s6 + $0x20] sm:$0xf]
      %v402 = vld [vmem:[%s6 + $0x24] sm:$0xf]
      %v403 = vld [vmem:[%s6 + $0x28] sm:$0xf]
      %v404 = vld [vmem:[%s6 + $0x2c] sm:$0xf]
      %v405 = vld [vmem:[%s6 + $0x30] sm:$0xf]
      %v406 = vld [vmem:[%s6 + $0x34] sm:$0xf]
      %v407 = vld [vmem:[%s6 + $0x38] sm:$0xf]
      %v408 = vld [vmem:[%s6 + $0x3c] sm:$0xf]
      %v409 = vlaneseq
      %v410 = vand.u32 %v409, 127
      %411 = vset.pattern.permute.xlu0 0
      %412 = vperm.xlu0 %411, %v391
      %v413 = vpop.permute.xlu0 %412
      %vm414 = vcmp.eq.s32.totalorder %v413, %v410
      %v415 = vsel %vm414, 1.0, 0.0
      %vm416 = vcmp.ge.s32.totalorder %v391, 0
      %v417 = vsel %vm416, 1, 0
      %v418 = vcvt.s32.f32 %v417
      %419 = vset.pattern.permute.xlu0 1
      %420 = vperm.xlu0 %419, %v391
      %v421 = vpop.permute.xlu0 %420
      %vm422 = vcmp.eq.s32.totalorder %v421, %v410
      %v423 = vsel %vm422, 1.0, 0.0
      %424 = vset.pattern.permute.xlu0 2
      %425 = vperm.xlu0 %424, %v391
      %v426 = vpop.permute.xlu0 %425
      %vm427 = vcmp.eq.s32.totalorder %v426, %v410
      %v428 = vsel %vm427, 1.0, 0.0
      %429 = vset.pattern.permute.xlu0 3
      %430 = vperm.xlu0 %429, %v391
      %v431 = vpop.permute.xlu0 %430
      %vm432 = vcmp.eq.s32.totalorder %v431, %v410
      %v433 = vsel %vm432, 1.0, 0.0
      %v434 = vpack.c.bf16 %v423, %v415
      %v435 = vpack.c.bf16 %v433, %v428
      %437 = vrot.lane.b32.xlu0 %v418, 127
      %v438 = vpop.permute.xlu0 %437
      %439 = vrot.lane.b32.xlu0 %v418, 126
      %v440 = vpop.permute.xlu0 %439
      %441 = vrot.lane.b32.xlu0 %v418, 125
      %v442 = vpop.permute.xlu0 %441
      %v443 = vld [vmem:[%s370] sm:$0xf]
      %v444 = vld [vmem:[%s374] sm:$0xf]
      %vm445 = vcmask 64512
      %v447 = vsel %vm445, %v434, 0
      %v450 = vsel %vm445, %v435, 0
      %vm452 = vcmask 1043456
      %v454 = vsel %vm452, %v444, 0
      %456 = vmatpush.bf16.msra.mxu0 0
      %457 = vmatpush.bf16.msra.mxu0 0
      %458 = vmatpush.bf16.msra.mxu0 0
      %459 = vmatpush.bf16.msra.mxu0 0
      %460 = vmatpush.bf16.msra.mxu0 0
      %461 = vmatpush.bf16.msra.mxu0 0
      %462 = vmatpush.bf16.msra.mxu0 0
      %463 = vmatpush.bf16.msra.mxu0 %v454
      %464 = vmatmul.bf16.gmra.mxu0 %v447
      %v465 = vpop.f32.mrf.mxu0
      %v466 = vadd.f32 0.0, %v465
      %v467 = vpop.f32.mrf.mxu0
      %v468 = vadd.f32 0.0, %v467
      %469 = vmatmul.bf16.gmra.mxu0 %v450
      %v470 = vpop.f32.mrf.mxu0
      %v471 = vadd.f32 0.0, %v470
      %v472 = vpop.f32.mrf.mxu0
      %v473 = vadd.f32 0.0, %v472
      %474 = vdwg.mxu0
      %v476 = vsel %vm452, %v443, 0
      %478 = vmatpush.bf16.msra.mxu0 0
      %479 = vmatpush.bf16.msra.mxu0 0
      %480 = vmatpush.bf16.msra.mxu0 0
      %481 = vmatpush.bf16.msra.mxu0 0
      %482 = vmatpush.bf16.msra.mxu0 0
      %483 = vmatpush.bf16.msra.mxu0 0
      %484 = vmatpush.bf16.msra.mxu0 0
      %485 = vmatpush.bf16.msra.mxu0 %v476
      %486 = vmatmul.bf16.gmra.mxu0 %v447
      %v487 = vpop.f32.mrf.mxu0
      %v488 = vadd.f32 %v466, %v487
      %v489 = vpop.f32.mrf.mxu0
      %v490 = vadd.f32 %v468, %v489
      %491 = vmatmul.bf16.gmra.mxu0 %v450
      %v492 = vpop.f32.mrf.mxu0
      %v493 = vadd.f32 %v471, %v492
      %v494 = vpop.f32.mrf.mxu0
      %v495 = vadd.f32 %v473, %v494
      %496 = vdwg.mxu0
      %v497 = vld [vmem:[%s378] sm:$0xf]
      %v498 = vld [vmem:[%s382] sm:$0xf]
      %v500 = vsel %vm452, %v498, 0
      %502 = vmatpush.bf16.msra.mxu0 0
      %503 = vmatpush.bf16.msra.mxu0 0
      %504 = vmatpush.bf16.msra.mxu0 0
      %505 = vmatpush.bf16.msra.mxu0 0
      %506 = vmatpush.bf16.msra.mxu0 0
      %507 = vmatpush.bf16.msra.mxu0 0
      %508 = vmatpush.bf16.msra.mxu0 0
      %509 = vmatpush.bf16.msra.mxu0 %v500
      %510 = vmatmul.bf16.gmra.mxu0 %v447
      %v511 = vpop.f32.mrf.mxu0
      %v512 = vadd.f32 0.0, %v511
      %v513 = vpop.f32.mrf.mxu0
      %v514 = vadd.f32 0.0, %v513
      %515 = vmatmul.bf16.gmra.mxu0 %v450
      %v516 = vpop.f32.mrf.mxu0
      %v517 = vadd.f32 0.0, %v516
      %v518 = vpop.f32.mrf.mxu0
      %v519 = vadd.f32 0.0, %v518
      %520 = vdwg.mxu0
      %v522 = vsel %vm452, %v497, 0
      %524 = vmatpush.bf16.msra.mxu0 0
      %525 = vmatpush.bf16.msra.mxu0 0
      %526 = vmatpush.bf16.msra.mxu0 0
      %527 = vmatpush.bf16.msra.mxu0 0
      %528 = vmatpush.bf16.msra.mxu0 0
      %529 = vmatpush.bf16.msra.mxu0 0
      %530 = vmatpush.bf16.msra.mxu0 0
      %531 = vmatpush.bf16.msra.mxu0 %v522
      %532 = vmatmul.bf16.gmra.mxu0 %v447
      %v533 = vpop.f32.mrf.mxu0
      %v534 = vadd.f32 %v512, %v533
      %v535 = vpop.f32.mrf.mxu0
      %v536 = vadd.f32 %v514, %v535
      %537 = vmatmul.bf16.gmra.mxu0 %v450
      %v538 = vpop.f32.mrf.mxu0
      %v539 = vadd.f32 %v517, %v538
      %v540 = vpop.f32.mrf.mxu0
      %v541 = vadd.f32 %v519, %v540
      %542 = vdwg.mxu0
      %v543 = vsub.f32 %v392, %v488
      %v544 = vsub.f32 %v392, %v490
      %v545 = vsub.f32 %v392, %v493
      %v546 = vsub.f32 %v392, %v495
      %v547 = vand.u32 2147483647, %v543
      %v548 = vand.u32 2147483647, %v544
      %v549 = vand.u32 2147483647, %v545
      %v550 = vand.u32 2147483647, %v546
      %v551 = vpack.c.bf16 %v547, %v547
      %v552 = vpack.c.bf16 %v548, %v548
      %v553 = vpack.c.bf16 %v549, %v549
      %v554 = vpack.c.bf16 %v550, %v550
      %v555 = vunpack.c.l.bf16 %v551
      %v556 = vunpack.c.l.bf16 %v552
      %v557 = vunpack.c.l.bf16 %v553
      %v558 = vunpack.c.l.bf16 %v554
      %v559 = vsub.f32 %v547, %v555
      %v560 = vsub.f32 %v548, %v556
      %v561 = vsub.f32 %v549, %v557
      %v562 = vsub.f32 %v550, %v558
      %v563 = vpack.c.bf16 %v560, %v559
      %v564 = vpack.c.bf16 %v562, %v561
      %v581 = vunpack.c.l.b16 %v393
      %v582 = vunpack.c.l.b16 %v394
      %v583 = vunpack.c.l.b16 %v395
      %v584 = vunpack.c.l.b16 %v396
      %v585 = vunpack.c.l.b16 %v397
      %v586 = vunpack.c.l.b16 %v398
      %v587 = vunpack.c.l.b16 %v399
      %v588 = vunpack.c.l.b16 %v400
      %v589 = vunpack.c.l.b16 %v401
      %v590 = vunpack.c.l.b16 %v402
      %v591 = vunpack.c.l.b16 %v403
      %v592 = vunpack.c.l.b16 %v404
      %v593 = vunpack.c.l.b16 %v405
      %v594 = vunpack.c.l.b16 %v406
      %v595 = vunpack.c.l.b16 %v407
      %v596 = vunpack.c.l.b16 %v408
      %v597 = vpack.c.b16 %v582, %v581
      %v598 = vpack.c.b16 %v584, %v583
      %v599 = vpack.c.b16 %v586, %v585
      %v600 = vpack.c.b16 %v588, %v587
      %v601 = vpack.c.b16 %v590, %v589
      %v602 = vpack.c.b16 %v592, %v591
      %v603 = vpack.c.b16 %v594, %v593
      %v604 = vpack.c.b16 %v596, %v595
      %613 = vmatpush.bf16.msra.mxu0 %v604
      %614 = vmatpush.bf16.msra.mxu0 %v603
      %615 = vmatpush.bf16.msra.mxu0 %v602
      %616 = vmatpush.bf16.msra.mxu0 %v601
      %617 = vmatpush.bf16.msra.mxu0 %v600
      %618 = vmatpush.bf16.msra.mxu0 %v599
      %619 = vmatpush.bf16.msra.mxu0 %v598
      %620 = vmatpush.bf16.msra.mxu0 %v597
      %621 = vmatmul.bf16.gmra.mxu0 %v563
      %v622 = vpop.f32.mrf.mxu0
      %v623 = vadd.f32 0.0, %v622
      %v624 = vpop.f32.mrf.mxu0
      %v625 = vadd.f32 0.0, %v624
      %626 = vmatmul.bf16.gmra.mxu0 %v564
      %v627 = vpop.f32.mrf.mxu0
      %v628 = vadd.f32 0.0, %v627
      %v629 = vpop.f32.mrf.mxu0
      %v630 = vadd.f32 0.0, %v629
      %631 = vdwg.mxu0
      %v636 = vunpack.c.l.b16 %v551
      %v637 = vunpack.c.l.b16 %v552
      %v638 = vunpack.c.l.b16 %v553
      %v639 = vunpack.c.l.b16 %v554
      %v640 = vpack.c.b16 %v637, %v636
      %v641 = vpack.c.b16 %v639, %v638
      %644 = vmatpush.bf16.msra.mxu0 %v604
      %645 = vmatpush.bf16.msra.mxu0 %v603
      %646 = vmatpush.bf16.msra.mxu0 %v602
      %647 = vmatpush.bf16.msra.mxu0 %v601
      %648 = vmatpush.bf16.msra.mxu0 %v600
      %649 = vmatpush.bf16.msra.mxu0 %v599
      %650 = vmatpush.bf16.msra.mxu0 %v598
      %651 = vmatpush.bf16.msra.mxu0 %v597
      %652 = vmatmul.bf16.gmra.mxu0 %v640
      %v653 = vpop.f32.mrf.mxu0
      %v654 = vadd.f32 %v623, %v653
      %v655 = vpop.f32.mrf.mxu0
      %v656 = vadd.f32 %v625, %v655
      %657 = vmatmul.bf16.gmra.mxu0 %v641
      %v658 = vpop.f32.mrf.mxu0
      %v659 = vadd.f32 %v628, %v658
      %v660 = vpop.f32.mrf.mxu0
      %v661 = vadd.f32 %v630, %v660
      %662 = vdwg.mxu0
      %v663 = vmul.f32 %v654, -0.17677669
      %v664 = vmul.f32 %v656, -0.17677669
      %v665 = vmul.f32 %v659, -0.17677669
      %v666 = vmul.f32 %v661, -0.17677669
      %v667 = vmul.f32 %v663, 1.442695
      %v668 = vpow.pop %v667
      %v669 = vmul.f32 %v664, 1.442695
      %v670 = vpow.pop %v669
      %v671 = vmul.f32 %v665, 1.442695
      %v672 = vpow.pop %v671
      %v673 = vmul.f32 %v666, 1.442695
      %v674 = vpow.pop %v673
      %v675 = vmul.f32 %v668, %v534
      %v676 = vmul.f32 %v670, %v536
      %v677 = vmul.f32 %v672, %v539
      %v678 = vmul.f32 %v674, %v541
      %v679 = vadd.f32 %v675, %v676
      %v680 = vadd.f32 %v679, %v677
      %v681 = vadd.f32 %v680, %v678
      %682 = vset.pattern.permute.xlu0 0
      %683 = vperm.xlu0 %682, %v418
      %v684 = vpop.permute.xlu0 %683
      %686 = vset.pattern.permute.xlu0 0
      %687 = vperm.xlu0 %686, %v438
      %v688 = vpop.permute.xlu0 %687
      %690 = vset.pattern.permute.xlu0 0
      %691 = vperm.xlu0 %690, %v440
      %v692 = vpop.permute.xlu0 %691
      %694 = vset.pattern.permute.xlu0 0
      %695 = vperm.xlu0 %694, %v442
      %v696 = vpop.permute.xlu0 %695
      %v698 = vmul.f32 %v668, %v684
      %v699 = vmul.f32 %v670, %v688
      %v700 = vmul.f32 %v672, %v692
      %v701 = vmul.f32 %v674, %v696
      %v702 = vadd.f32 %v698, %v699
      %v703 = vadd.f32 %v702, %v700
      %v704 = vadd.f32 %v703, %v701
      %v705 = vadd.f32 %v704, 1.0
      %v706 = vrcp.pop %v705
      %v707 = vmul.f32 %v705, %v706
      %v708 = vsub.f32 1.0, %v707
      %v709 = vmul.f32 %v706, %v708
      %v710 = vadd.f32 %v706, %v709
      %vm711 = vweird.f32 %v705
      %vm712 = vweird.f32 %v706
      %vm713 = vmor %vm711, %vm712
      %v714 = vsel %vm713, %v706, %v710
      %v715 = vand.u32 2147483647, %v705
      %vm716 = vcmp.eq.f32.partialorder %v715, 8.507059e+37
      %v717 = vand.u32 %v705, 2147483648
      %v718 = vor.u32 1.1754944e-38, %v717
      %v719 = vsel %vm716, %v718, %v714
      %v720 = vmul.f32 %v681, %v719
      %721 = vst [vmem:[%s389] sm:$0xff] %v720
      %p722 = scmp.lt.s32.totalorder %s22, 1
      %s723 = scalar_select %p722, %s22, 1
      %p724 = scmp.lt.s32.totalorder %s23, 0
      %s725 = scalar_select %p724, %s23, 0
      %s726 = sadd.s32 %s725, %s723
      %s727 = smul.addr %s726, 8
      %s728 = scalar_lea.vmem %s7, %s727
      // Predicated region
      $region49: #{l1attn_sparse.1} parent=47 // pred_check
        %p729 = pneg %p229
      $region50: #{l1attn_sparse.1} parent=47 // pred_check_branch
        %731 = sbr.rel (%p729) target = $region52
      $region51: #{l1attn_sparse.1} parent=47 // pred_region
        _
      $region52: #{l1attn_sparse.1} parent=47 // pred_fallthru
        _
    $region48: #{l1attn_sparse.1} parent=5 // pred_fallthru
      _
    %p732 = scmp.le.s32.totalorder 2, %s13
    // Predicated region
    $region53: #{l1attn_sparse.1} parent=5 // pred_check
      %p733 = pneg %p732
    $region54: #{l1attn_sparse.1} parent=5 // pred_check_branch
      %735 = sbr.rel (%p733) target = $region56
    $region55: #{l1attn_sparse.1} parent=5 // pred_region
      %s736 = ssub.s32 %s13, 2
      // Predicated region
      $region57: #{l1attn_sparse.1} parent=55 // pred_check
        %p737 = pneg %p235
      $region58: #{l1attn_sparse.1} parent=55 // pred_check_branch
        %739 = sbr.rel (%p737) target = $region60
      $region59: #{l1attn_sparse.1} parent=55 // pred_region
        %p740 = scmp.lt.s32.totalorder %s24, 1
        %s741 = scalar_select %p740, %s24, 1
        %p742 = scmp.lt.s32.totalorder %s25, 0
        %s743 = scalar_select %p742, %s25, 0
        %s744 = sadd.s32 %s743, %s741
        %s745 = smul.addr %s744, 8
        %s746 = scalar_lea.vmem %s7, %s745
      $region60: #{l1attn_sparse.1} parent=55 // pred_fallthru
        _
    $region56: #{l1attn_sparse.1} parent=5 // pred_fallthru
      _
  $region6: #{l1attn_sparse.1} parent=0 // loop_footer
    %s17 = sadd.s32 1, %s13
  $region7: #{l1attn_sparse.1} parent=0 // loop_footer_branch
    %12 = sbr.rel target = $region3
  $region8: #{l1attn_sparse.1} parent=0 // loop_exit
    _

</llo_original>
